<compile_context>
chip_gen: v5e
topology: v5e:2x2
jax: 0.10.0
libtpu: 0.0.40
codegen_flags: <defaults>
</compile_context>

<pallas_src>
import functools

import jax
import jax.numpy as jnp
from jax.experimental import pallas as pl
from jax.experimental.pallas import tpu as pltpu


def _leaky_relu_kernel(x_ref, o_ref, *, negative_slope):
    x = x_ref[...]
    # LeakyReLU(x) = x if x >= 0 else negative_slope * x
    # (exactly matches torch.nn.LeakyReLU, incl. NaN propagation and -0.0)
    slope = jnp.asarray(negative_slope, dtype=x.dtype)
    o_ref[...] = jnp.where(x >= 0, x, x * slope)


def leaky_relu(
    features: jax.Array,
    negative_slope: float,
    *,
    lane_width: int = 1024,
    target_block_bytes: int = 8 << 20,   # ~8 MiB blocks (v7x-friendly)
    min_pallas_bytes: int = 1 << 18,     # below 256 KiB, plain XLA is faster
):
    """Elementwise LeakyReLU via a Pallas TPU kernel."""
    assert lane_width % 128 == 0, "lane_width must be a multiple of 128"

    orig_shape = features.shape
    dtype = features.dtype
    itemsize = jnp.dtype(dtype).itemsize
    total = features.size
    nbytes = total * itemsize

    # --- Small-input fast path: launch + repack overhead would dominate. -----
    if total == 0 or nbytes < min_pallas_bytes:
        slope = jnp.asarray(negative_slope, dtype)
        return jnp.where(features >= 0, features, features * slope)

    flat = features.reshape(-1)

    # --- Lane-dense repack without extra HBM passes ---------------------------
    # Pick the largest lane width (multiple of 128) that divides the total size
    # -> the reshape is free (no copy).  Only truly ragged sizes fall back to a
    # pad of < lane_width elements.
    lw = None
    for cand in (lane_width, 512, 256, 128):
        if cand <= lane_width and total % cand == 0:
            lw = cand
            break
    padded = False
    if lw is None:
        lw = lane_width
        padded_total = pl.cdiv(total, lw) * lw
        flat = jnp.pad(flat, (0, padded_total - total))  # LeakyReLU(0) == 0
        padded = True

    x2d = flat.reshape(-1, lw)
    n_rows = x2d.shape[0]

    # --- Block sizing ----------------------------------------------------------
    # Target ~target_block_bytes per block; keep block_rows a multiple of 8.
    row_tile = max(8, (target_block_bytes // (lw * itemsize)) // 8 * 8)
    if n_rows >= 16:
        # Keep >= 2 grid steps so dual-TensorCore chips (v7x) split the work.
        half = (((n_rows + 1) // 2) + 7) // 8 * 8
        block_rows = min(row_tile, half)
    else:
        # Single block covering the full (small) array.
        block_rows = n_rows
    grid_rows = pl.cdiv(n_rows, block_rows)  # partial last block is masked

    # --- VMEM budget: double-buffered input + output blocks + headroom --------
    block_bytes = block_rows * lw * itemsize
    vmem_limit = max(min(4 * block_bytes + (4 << 20), 48 << 20), 16 << 20)

    kernel = functools.partial(_leaky_relu_kernel, negative_slope=negative_slope)

    extra = {}
    if padded:
        # x2d is a fresh intermediate (produced by the pad) -> safe to alias
        # without forcing XLA into a defensive copy; saves HBM footprint.
        extra["input_output_aliases"] = {0: 0}

    out2d = pl.pallas_call(
        kernel,
        out_shape=jax.ShapeDtypeStruct(x2d.shape, dtype),
        grid=(grid_rows,),
        in_specs=[pl.BlockSpec((block_rows, lw), lambda i: (i, 0))],
        out_specs=pl.BlockSpec((block_rows, lw), lambda i: (i, 0)),
        compiler_params=pltpu.CompilerParams(
            dimension_semantics=("parallel",),
            vmem_limit_bytes=vmem_limit,
        ),
        **extra,
    )(x2d)

    out_flat = out2d.reshape(-1)
    if padded:
        out_flat = out_flat[:total]
    return out_flat.reshape(orig_shape)


class LeakyReLUPallas:
    """JAX/Pallas equivalent of the PyTorch LeakyReLU module.

    The PyTorch forward mutates `cloud.features` in place; PCloud is just a
    struct holding `.features`, so here we transform the features array
    directly and return it.
    """

    def __init__(self, negative_slope: float) -> None:
        self.negative_slope = negative_slope

    def __repr__(self) -> str:
        return f"LeakyRelU(negative_slope: {self.negative_slope})"

    def __call__(self, features: jax.Array) -> jax.Array:
        return leaky_relu(features, self.negative_slope)


if __name__ == "__main__":
    key = jax.random.PRNGKey(0)
    k1, k2, k3 = jax.random.split(key, 3)
    module = LeakyReLUPallas(negative_slope=0.1)

    def ref(x, slope=0.1):
        return jnp.where(x >= 0, x, x * jnp.asarray(slope, x.dtype))

    # 1) Medium aligned input -> Pallas path, 2 grid steps (feeds both TCs on v7x).
    x1 = jax.random.normal(k1, (1024, 256), dtype=jnp.float32)  # 1 MiB
    y1 = jax.block_until_ready(module(x1))
    assert y1.shape == x1.shape and y1.dtype == x1.dtype
    assert jnp.allclose(y1, ref(x1)), "mismatch (aligned)"

    # 2) 128-aligned rows that don't divide the block -> partial last block masking.
    x2 = jax.random.normal(k2, (4099, 128), dtype=jnp.float32)
    y2 = jax.block_until_ready(module(x2))
    assert jnp.allclose(y2, ref(x2)), "mismatch (partial block)"

    # 3) Ragged total, forced through the Pallas pad fallback.
    x3 = jax.random.normal(k3, (1000, 7), dtype=jnp.float32)
    y3 = jax.block_until_ready(leaky_relu(x3, 0.1, min_pallas_bytes=0))
    assert jnp.allclose(y3, ref(x3)), "mismatch (ragged/pad fallback)"

    # 4) Tiny point-cloud-sized input -> XLA fast path (no pallas_call).
    x4 = jax.random.normal(key, (256, 32), dtype=jnp.float32)
    y4 = jax.block_until_ready(module(x4))
    assert jnp.allclose(y4, ref(x4)), "mismatch (small fast path)"

    print("KERNEL_OK")
</pallas_src>

<mosaic_0001>
module attributes {stable_mosaic.version = 11 : i64} {
  func.func @_leaky_relu_kernel(%arg0: i32, %arg1: memref<128x1024xf32, #tpu.memory_space<vmem>>, %arg2: memref<128x1024xf32, #tpu.memory_space<vmem>>) attributes {dimension_semantics = [#tpu.dimension_semantics<parallel>], iteration_bounds = array<i64: 2>, scalar_prefetch = 0 : i64, scratch_operands = 0 : i64, tpu.core_type = #tpu.core_type<tc>, window_params = [{transform_indices = @transform_0, window_bounds = array<i64: 128, 1024>}, {transform_indices = @transform_1, window_bounds = array<i64: 128, 1024>}]} {
    %c0 = arith.constant 0 : index
    %c0_0 = arith.constant 0 : index
    %0 = vector.load %arg1[%c0, %c0_0] : memref<128x1024xf32, #tpu.memory_space<vmem>>, vector<128x1024xf32>
    %cst = arith.constant 0.000000e+00 : f32
    %1 = vector.broadcast %cst : f32 to vector<128x1024xf32>
    %2 = arith.cmpf oge, %0, %1 : vector<128x1024xf32>
    %cst_1 = arith.constant 1.000000e-01 : f32
    %3 = vector.broadcast %cst_1 : f32 to vector<128x1024xf32>
    %4 = arith.mulf %0, %3 : vector<128x1024xf32>
    %5 = arith.select %2, %0, %4 : vector<128x1024xi1>, vector<128x1024xf32>
    %c0_2 = arith.constant 0 : index
    %c0_3 = arith.constant 0 : index
    %6 = vector.load %arg2[%c0_2, %c0_3] : memref<128x1024xf32, #tpu.memory_space<vmem>>, vector<128x1024xf32>
    tpu.vector_store %arg2[%c0_2, %c0_3], %5 {strides = array<i32>} : memref<128x1024xf32, #tpu.memory_space<vmem>>, vector<128x1024xf32>,
    return
  }
  func.func @transform_0(%arg0: i32) -> (i32, i32) {
    %c0_i32 = arith.constant 0 : i32
    %c0_i32_0 = arith.constant 0 : i32
    return %arg0, %c0_i32 : i32, i32
  }
  func.func @transform_1(%arg0: i32) -> (i32, i32) {
    %c0_i32 = arith.constant 0 : i32
    %c0_i32_0 = arith.constant 0 : i32
    return %arg0, %c0_i32 : i32, i32
  }
}

</mosaic_0001>

<llo_original>
// kernel: tpu_custom_call.1
$region0: #{tpu_custom_call.1}
  #allocation0 [shape = 'u32[]', space=smem, size = 0x4, offset = 0x4, fixed_abs, tag = 'smem constant byte address 0x4 - core index']
  #allocation1 [shape = 'u32[72,128]{1,0:T(1,128)}', space=vmem, size = 0x9000, scoped, tag = 'internal scratch']
  %s0 = inlined_call_operand.hbm [shape: f32[256,1024], index: 0, kind: input, shape index: {}]
  %s1 = inlined_call_operand.hbm [shape: f32[256,1024], index: 1, kind: output, shape index: {}]
  %s2 = sld [smem:[#allocation0]]
  $region41: #{tpu_custom_call.1} parent=0
    _
  %s4 = ssub.s32 1, %s2
  %s5 = scalar_select 0, %s4, %s2
  $region1: #{tpu_custom_call.1} parent=0
    #allocation2 [shape = 'u8[1048576]{0}', space=vmem, size = 0x100000, scoped, tag = 'input window, operand 0']
    #allocation3 [shape = 's32[2]{0}', space=sflag, size = 0x8, scoped, tag = 'scoped memory for tpu_custom_call.1']
    #allocation4 [shape = 's32[2]{0}', space=sflag, size = 0x8, scoped, tag = 'scoped memory for tpu_custom_call.1']
    #allocation5 [shape = 'u8[1048576]{0}', space=vmem, size = 0x100000, scoped, tag = 'output window, operand 0']
    %6 = vsyncpa [#allocation3], 0
    %s7 = scalar_lea.sflag [#allocation3], 1
    %8 = vsyncpa %s7, 0
    %9 = vsyncpa [#allocation4], 0
    %s10 = scalar_lea.sflag [#allocation4], 1
    %11 = vsyncpa %s10, 0
    loop: start=0, step=1, limit=4
    $region2: #{tpu_custom_call.1} parent=1 // loop_pre_header
      _
    $region3: #{tpu_custom_call.1} parent=1 // loop_header
      %s13 = sphi 0, %s17
      %p14 = scmp.ge.s32.totalorder %s13, 4
      %s23 = sphi 0, %s25
      %s26 = sphi 0, %s23
      %s27 = sphi 0, %s26
      %s43 = sphi 0, %s27
      %s49 = sphi 0, %s51
      %s52 = sphi 0, %s49
      %s53 = sphi 0, %s52
      %s69 = sphi 0, %s53
    $region4: #{tpu_custom_call.1} parent=1 // loop_header_branch
      %16 = sbr.rel (%p14) target = $region8
    $region5: #{tpu_custom_call.1} parent=1 // loop_body
      %s18 = ssub.s32 %s13, 1
      %s19 = ssub.s32 %s13, 2
      %s20 = sadd.s32 %s13, 1
      %s21 = ssub.s32 %s13, %s20
      %p22 = scmp.eq.s32.totalorder %s21, 0
      %s24 = sadd.s32 %s23, 1
      %s25 = scalar_select %p22, %s23, %s24
      %p28 = pneg %p22
      %p29 = scmp.eq.s32.totalorder %s13, 1
      %p30 = por %p28, %p29
      %p31 = scmp.ne.s32.totalorder %s23, %s26
      %p32 = scmp.eq.s32.totalorder %s13, 0
      %p33 = por %p31, %p32
      %p34 = scmp.ne.s32.totalorder %s23, %s26
      %p35 = scmp.eq.s32.totalorder %s18, 1
      %p36 = por %p34, %p35
      %p37 = scmp.ne.s32.totalorder %s26, %s27
      %p38 = scmp.eq.s32.totalorder %s18, 0
      %p39 = por %p37, %p38
      %p40 = scmp.ne.s32.totalorder %s26, %s27
      %p41 = scmp.eq.s32.totalorder %s19, 1
      %p42 = por %p40, %p41
      %p44 = scmp.ne.s32.totalorder %s27, %s43
      %p45 = scmp.eq.s32.totalorder %s19, 0
      %p46 = por %p44, %p45
      %s47 = ssub.s32 %s13, %s20
      %p48 = scmp.eq.s32.totalorder %s47, 0
      %s50 = sadd.s32 %s49, 1
      %s51 = scalar_select %p48, %s49, %s50
      %p54 = pneg %p48
      %p55 = scmp.eq.s32.totalorder %s13, 1
      %p56 = por %p54, %p55
      %p57 = scmp.ne.s32.totalorder %s49, %s52
      %p58 = scmp.eq.s32.totalorder %s13, 0
      %p59 = por %p57, %p58
      %p60 = scmp.ne.s32.totalorder %s49, %s52
      %p61 = scmp.eq.s32.totalorder %s18, 1
      %p62 = por %p60, %p61
      %p63 = scmp.ne.s32.totalorder %s52, %s53
      %p64 = scmp.eq.s32.totalorder %s18, 0
      %p65 = por %p63, %p64
      %p66 = scmp.ne.s32.totalorder %s52, %s53
      %p67 = scmp.eq.s32.totalorder %s19, 1
      %p68 = por %p66, %p67
      %p70 = scmp.ne.s32.totalorder %s53, %s69
      %p71 = scmp.eq.s32.totalorder %s19, 0
      %p72 = por %p70, %p71
      %p73 = scmp.le.s32.totalorder 1, %s13
      %p74 = scmp.lt.s32.totalorder %s13, 3
      %p75 = pnand %p73, %p74
      %p76 = pneg %p75
      // Predicated region
      $region9: #{tpu_custom_call.1} parent=5 // pred_check
        _
      $region10: #{tpu_custom_call.1} parent=5 // pred_check_branch
        %78 = sbr.rel (%p75) target = $region12
      $region11: #{tpu_custom_call.1} parent=5 // pred_region
        %s79 = ssub.s32 %s13, 1
      $region12: #{tpu_custom_call.1} parent=5 // pred_fallthru
        _
      %p80 = scmp.lt.s32.totalorder %s13, 2
      // Predicated region
      $region13: #{tpu_custom_call.1} parent=5 // pred_check
        %p81 = pneg %p80
      $region14: #{tpu_custom_call.1} parent=5 // pred_check_branch
        %83 = sbr.rel (%p81) target = $region16
      $region15: #{tpu_custom_call.1} parent=5 // pred_region
        // Predicated region
        $region17: #{tpu_custom_call.1} parent=15 // pred_check
          %p84 = pneg %p33
        $region18: #{tpu_custom_call.1} parent=15 // pred_check_branch
          %86 = sbr.rel (%p84) target = $region20
        $region19: #{tpu_custom_call.1} parent=15 // pred_region
          %s87 = sand.u32 %s23, 1
          %s88 = scalar_lea.sflag [#allocation3], %s87
          %s89 = sand.u32 %s23, 1
          %s90 = smul.addr %s89, 1024
          %s91 = scalar_lea.vmem [#allocation2], %s90
          %s92 = smul.u32 16, %s13
          %94 = vsyncadd %s88, 0
          %s95 = smul.addr %s92, 8
          %s96 = smul.addr %s95, 8
          %s97 = scalar_lea.hbm %s0, %s96
          %s98 = sshll.u32 %s97, 4
          %s99 = int_to_ptr.hbm [resolvable:$true] %s98
          %s100 = sshll.u32 %s91, 4
          %s101 = int_to_ptr.vmem [resolvable:$true] %s100
          %106 = dma.hbm_to_vmem [thread:$0]  %s99, 16384, %s101, %s88, 1024, 1024, 64
        $region20: #{tpu_custom_call.1} parent=15 // pred_fallthru
          _
      $region16: #{tpu_custom_call.1} parent=5 // pred_fallthru
        _
      %p107 = scmp.le.s32.totalorder 1, %s13
      %p108 = scmp.lt.s32.totalorder %s13, 3
      %p109 = pnand %p107, %p108
      %p110 = pneg %p109
      // Predicated region
      $region21: #{tpu_custom_call.1} parent=5 // pred_check
        _
      $region22: #{tpu_custom_call.1} parent=5 // pred_check_branch
        %112 = sbr.rel (%p109) target = $region24
      $region23: #{tpu_custom_call.1} parent=5 // pred_region
        %s113 = ssub.s32 %s13, 1
        %s114 = sand.u32 %s26, 1
        %s115 = scalar_lea.sflag [#allocation3], %s114
        %s116 = sand.u32 %s26, 1
        %s117 = smul.addr %s116, 1024
        %s118 = scalar_lea.vmem [#allocation2], %s117
        // Predicated region
        $region25: #{tpu_custom_call.1} parent=23 // pred_check
          %p119 = pneg %p39
        $region26: #{tpu_custom_call.1} parent=23 // pred_check_branch
          %121 = sbr.rel (%p119) target = $region28
        $region27: #{tpu_custom_call.1} parent=23 // pred_region
          %123 = dma.done %s115, 16384
        $region28: #{tpu_custom_call.1} parent=23 // pred_fallthru
          _
        %s124 = sand.u32 %s26, 1
        %s125 = scalar_lea.sflag [#allocation3], %s124
        %s126 = sand.u32 %s26, 1
        %s127 = smul.addr %s126, 1024
        %s128 = scalar_lea.vmem [#allocation2], %s127
        %p129 = pneg %p39
        %p130 = pneg %p36
        %p131 = pneg %p65
        %p132 = pneg %p62
        %s133 = sand.u32 %s52, 1
        %s134 = scalar_lea.sflag [#allocation4], %s133
        %s135 = sand.u32 %s52, 1
        %s136 = smul.addr %s135, 1024
        %s137 = scalar_lea.vmem [#allocation5], %s136
        %s138 = smul.u32 16, %s18
        %s139 = smul.u32 16, %s18
        %v140 = vld [vmem:[%s118] sm:$0xff]
        %v141 = vld [vmem:[%s118 + $0x8] sm:$0xff]
        %v142 = vld [vmem:[%s118 + $0x10] sm:$0xff]
        %v143 = vld [vmem:[%s118 + $0x18] sm:$0xff]
        %v144 = vld [vmem:[%s118 + $0x20] sm:$0xff]
        %v145 = vld [vmem:[%s118 + $0x28] sm:$0xff]
        %v146 = vld [vmem:[%s118 + $0x30] sm:$0xff]
        %v147 = vld [vmem:[%s118 + $0x38] sm:$0xff]
        %v148 = vld [vmem:[%s118 + $0x40] sm:$0xff]
        %v149 = vld [vmem:[%s118 + $0x48] sm:$0xff]
        %v150 = vld [vmem:[%s118 + $0x50] sm:$0xff]
        %v151 = vld [vmem:[%s118 + $0x58] sm:$0xff]
        %v152 = vld [vmem:[%s118 + $0x60] sm:$0xff]
        %v153 = vld [vmem:[%s118 + $0x68] sm:$0xff]
        %v154 = vld [vmem:[%s118 + $0x70] sm:$0xff]
        %v155 = vld [vmem:[%s118 + $0x78] sm:$0xff]
        %v156 = vld [vmem:[%s118 + $0x80] sm:$0xff]
        %v157 = vld [vmem:[%s118 + $0x88] sm:$0xff]
        %v158 = vld [vmem:[%s118 + $0x90] sm:$0xff]
        %v159 = vld [vmem:[%s118 + $0x98] sm:$0xff]
        %v160 = vld [vmem:[%s118 + $0xa0] sm:$0xff]
        %v161 = vld [vmem:[%s118 + $0xa8] sm:$0xff]
        %v162 = vld [vmem:[%s118 + $0xb0] sm:$0xff]
        %v163 = vld [vmem:[%s118 + $0xb8] sm:$0xff]
        %v164 = vld [vmem:[%s118 + $0xc0] sm:$0xff]
        %v165 = vld [vmem:[%s118 + $0xc8] sm:$0xff]
        %v166 = vld [vmem:[%s118 + $0xd0] sm:$0xff]
        %v167 = vld [vmem:[%s118 + $0xd8] sm:$0xff]
        %v168 = vld [vmem:[%s118 + $0xe0] sm:$0xff]
        %v169 = vld [vmem:[%s118 + $0xe8] sm:$0xff]
        %v170 = vld [vmem:[%s118 + $0xf0] sm:$0xff]
        %v171 = vld [vmem:[%s118 + $0xf8] sm:$0xff]
        %v172 = vld [vmem:[%s118 + $0x100] sm:$0xff]
        %v173 = vld [vmem:[%s118 + $0x108] sm:$0xff]
        %v174 = vld [vmem:[%s118 + $0x110] sm:$0xff]
        %v175 = vld [vmem:[%s118 + $0x118] sm:$0xff]
        %v176 = vld [vmem:[%s118 + $0x120] sm:$0xff]
        %v177 = vld [vmem:[%s118 + $0x128] sm:$0xff]
        %v178 = vld [vmem:[%s118 + $0x130] sm:$0xff]
        %v179 = vld [vmem:[%s118 + $0x138] sm:$0xff]
        %v180 = vld [vmem:[%s118 + $0x140] sm:$0xff]
        %v181 = vld [vmem:[%s118 + $0x148] sm:$0xff]
        %v182 = vld [vmem:[%s118 + $0x150] sm:$0xff]
        %v183 = vld [vmem:[%s118 + $0x158] sm:$0xff]
        %v184 = vld [vmem:[%s118 + $0x160] sm:$0xff]
        %v185 = vld [vmem:[%s118 + $0x168] sm:$0xff]
        %v186 = vld [vmem:[%s118 + $0x170] sm:$0xff]
        %v187 = vld [vmem:[%s118 + $0x178] sm:$0xff]
        %v188 = vld [vmem:[%s118 + $0x180] sm:$0xff]
        %v189 = vld [vmem:[%s118 + $0x188] sm:$0xff]
        %v190 = vld [vmem:[%s118 + $0x190] sm:$0xff]
        %v191 = vld [vmem:[%s118 + $0x198] sm:$0xff]
        %v192 = vld [vmem:[%s118 + $0x1a0] sm:$0xff]
        %v193 = vld [vmem:[%s118 + $0x1a8] sm:$0xff]
        %v194 = vld [vmem:[%s118 + $0x1b0] sm:$0xff]
        %v195 = vld [vmem:[%s118 + $0x1b8] sm:$0xff]
        %v196 = vld [vmem:[%s118 + $0x1c0] sm:$0xff]
        %v197 = vld [vmem:[%s118 + $0x1c8] sm:$0xff]
        %v198 = vld [vmem:[%s118 + $0x1d0] sm:$0xff]
        %v199 = vld [vmem:[%s118 + $0x1d8] sm:$0xff]
        %v200 = vld [vmem:[%s118 + $0x1e0] sm:$0xff]
        %v201 = vld [vmem:[%s118 + $0x1e8] sm:$0xff]
        %v202 = vld [vmem:[%s118 + $0x1f0] sm:$0xff]
        %v203 = vld [vmem:[%s118 + $0x1f8] sm:$0xff]
        %v204 = vld [vmem:[%s118 + $0x200] sm:$0xff]
        %v205 = vld [vmem:[%s118 + $0x208] sm:$0xff]
        %v206 = vld [vmem:[%s118 + $0x210] sm:$0xff]
        %v207 = vld [vmem:[%s118 + $0x218] sm:$0xff]
        %v208 = vld [vmem:[%s118 + $0x220] sm:$0xff]
        %v209 = vld [vmem:[%s118 + $0x228] sm:$0xff]
        %v210 = vld [vmem:[%s118 + $0x230] sm:$0xff]
        %v211 = vld [vmem:[%s118 + $0x238] sm:$0xff]
        %v212 = vld [vmem:[%s118 + $0x240] sm:$0xff]
        %v213 = vld [vmem:[%s118 + $0x248] sm:$0xff]
        %v214 = vld [vmem:[%s118 + $0x250] sm:$0xff]
        %v215 = vld [vmem:[%s118 + $0x258] sm:$0xff]
        %v216 = vld [vmem:[%s118 + $0x260] sm:$0xff]
        %v217 = vld [vmem:[%s118 + $0x268] sm:$0xff]
        %v218 = vld [vmem:[%s118 + $0x270] sm:$0xff]
        %v219 = vld [vmem:[%s118 + $0x278] sm:$0xff]
        %v220 = vld [vmem:[%s118 + $0x280] sm:$0xff]
        %v221 = vld [vmem:[%s118 + $0x288] sm:$0xff]
        %v222 = vld [vmem:[%s118 + $0x290] sm:$0xff]
        %v223 = vld [vmem:[%s118 + $0x298] sm:$0xff]
        %v224 = vld [vmem:[%s118 + $0x2a0] sm:$0xff]
        %v225 = vld [vmem:[%s118 + $0x2a8] sm:$0xff]
        %v226 = vld [vmem:[%s118 + $0x2b0] sm:$0xff]
        %v227 = vld [vmem:[%s118 + $0x2b8] sm:$0xff]
        %v228 = vld [vmem:[%s118 + $0x2c0] sm:$0xff]
        %v229 = vld [vmem:[%s118 + $0x2c8] sm:$0xff]
        %v230 = vld [vmem:[%s118 + $0x2d0] sm:$0xff]
        %v231 = vld [vmem:[%s118 + $0x2d8] sm:$0xff]
        %v232 = vld [vmem:[%s118 + $0x2e0] sm:$0xff]
        %v233 = vld [vmem:[%s118 + $0x2e8] sm:$0xff]
        %v234 = vld [vmem:[%s118 + $0x2f0] sm:$0xff]
        %v235 = vld [vmem:[%s118 + $0x2f8] sm:$0xff]
        %v236 = vld [vmem:[%s118 + $0x300] sm:$0xff]
        %v237 = vld [vmem:[%s118 + $0x308] sm:$0xff]
        %v238 = vld [vmem:[%s118 + $0x310] sm:$0xff]
        %v239 = vld [vmem:[%s118 + $0x318] sm:$0xff]
        %v240 = vld [vmem:[%s118 + $0x320] sm:$0xff]
        %v241 = vld [vmem:[%s118 + $0x328] sm:$0xff]
        %v242 = vld [vmem:[%s118 + $0x330] sm:$0xff]
        %v243 = vld [vmem:[%s118 + $0x338] sm:$0xff]
        %v244 = vld [vmem:[%s118 + $0x340] sm:$0xff]
        %v245 = vld [vmem:[%s118 + $0x348] sm:$0xff]
        %v246 = vld [vmem:[%s118 + $0x350] sm:$0xff]
        %v247 = vld [vmem:[%s118 + $0x358] sm:$0xff]
        %v248 = vld [vmem:[%s118 + $0x360] sm:$0xff]
        %v249 = vld [vmem:[%s118 + $0x368] sm:$0xff]
        %v250 = vld [vmem:[%s118 + $0x370] sm:$0xff]
        %v251 = vld [vmem:[%s118 + $0x378] sm:$0xff]
        %v252 = vld [vmem:[%s118 + $0x380] sm:$0xff]
        %v253 = vld [vmem:[%s118 + $0x388] sm:$0xff]
        %v254 = vld [vmem:[%s118 + $0x390] sm:$0xff]
        %v255 = vld [vmem:[%s118 + $0x398] sm:$0xff]
        %v256 = vld [vmem:[%s118 + $0x3a0] sm:$0xff]
        %v257 = vld [vmem:[%s118 + $0x3a8] sm:$0xff]
        %v258 = vld [vmem:[%s118 + $0x3b0] sm:$0xff]
        %v259 = vld [vmem:[%s118 + $0x3b8] sm:$0xff]
        %v260 = vld [vmem:[%s118 + $0x3c0] sm:$0xff]
        %v261 = vld [vmem:[%s118 + $0x3c8] sm:$0xff]
        %v262 = vld [vmem:[%s118 + $0x3d0] sm:$0xff]
        %v263 = vld [vmem:[%s118 + $0x3d8] sm:$0xff]
        %v264 = vld [vmem:[%s118 + $0x3e0] sm:$0xff]
        %v265 = vld [vmem:[%s118 + $0x3e8] sm:$0xff]
        %v266 = vld [vmem:[%s118 + $0x3f0] sm:$0xff]
        %v267 = vld [vmem:[%s118 + $0x3f8] sm:$0xff]
        %vm268 = vcmp.ge.f32.partialorder %v140, 0.0
        %vm269 = vcmp.ge.f32.partialorder %v141, 0.0
        %vm270 = vcmp.ge.f32.partialorder %v142, 0.0
        %vm271 = vcmp.ge.f32.partialorder %v143, 0.0
        %vm272 = vcmp.ge.f32.partialorder %v144, 0.0
        %vm273 = vcmp.ge.f32.partialorder %v145, 0.0
        %vm274 = vcmp.ge.f32.partialorder %v146, 0.0
        %vm275 = vcmp.ge.f32.partialorder %v147, 0.0
        %vm276 = vcmp.ge.f32.partialorder %v148, 0.0
        %vm277 = vcmp.ge.f32.partialorder %v149, 0.0
        %vm278 = vcmp.ge.f32.partialorder %v150, 0.0
        %vm279 = vcmp.ge.f32.partialorder %v151, 0.0
        %vm280 = vcmp.ge.f32.partialorder %v152, 0.0
        %vm281 = vcmp.ge.f32.partialorder %v153, 0.0
        %vm282 = vcmp.ge.f32.partialorder %v154, 0.0
        %vm283 = vcmp.ge.f32.partialorder %v155, 0.0
        %vm284 = vcmp.ge.f32.partialorder %v156, 0.0
        %vm285 = vcmp.ge.f32.partialorder %v157, 0.0
        %vm286 = vcmp.ge.f32.partialorder %v158, 0.0
        %vm287 = vcmp.ge.f32.partialorder %v159, 0.0
        %vm288 = vcmp.ge.f32.partialorder %v160, 0.0
        %vm289 = vcmp.ge.f32.partialorder %v161, 0.0
        %vm290 = vcmp.ge.f32.partialorder %v162, 0.0
        %vm291 = vcmp.ge.f32.partialorder %v163, 0.0
        %vm292 = vcmp.ge.f32.partialorder %v164, 0.0
        %vm293 = vcmp.ge.f32.partialorder %v165, 0.0
        %vm294 = vcmp.ge.f32.partialorder %v166, 0.0
        %vm295 = vcmp.ge.f32.partialorder %v167, 0.0
        %vm296 = vcmp.ge.f32.partialorder %v168, 0.0
        %vm297 = vcmp.ge.f32.partialorder %v169, 0.0
        %vm298 = vcmp.ge.f32.partialorder %v170, 0.0
        %vm299 = vcmp.ge.f32.partialorder %v171, 0.0
        %vm300 = vcmp.ge.f32.partialorder %v172, 0.0
        %vm301 = vcmp.ge.f32.partialorder %v173, 0.0
        %vm302 = vcmp.ge.f32.partialorder %v174, 0.0
        %vm303 = vcmp.ge.f32.partialorder %v175, 0.0
        %vm304 = vcmp.ge.f32.partialorder %v176, 0.0
        %vm305 = vcmp.ge.f32.partialorder %v177, 0.0
        %vm306 = vcmp.ge.f32.partialorder %v178, 0.0
        %vm307 = vcmp.ge.f32.partialorder %v179, 0.0
        %vm308 = vcmp.ge.f32.partialorder %v180, 0.0
        %vm309 = vcmp.ge.f32.partialorder %v181, 0.0
        %vm310 = vcmp.ge.f32.partialorder %v182, 0.0
        %vm311 = vcmp.ge.f32.partialorder %v183, 0.0
        %vm312 = vcmp.ge.f32.partialorder %v184, 0.0
        %vm313 = vcmp.ge.f32.partialorder %v185, 0.0
        %vm314 = vcmp.ge.f32.partialorder %v186, 0.0
        %vm315 = vcmp.ge.f32.partialorder %v187, 0.0
        %vm316 = vcmp.ge.f32.partialorder %v188, 0.0
        %vm317 = vcmp.ge.f32.partialorder %v189, 0.0
        %vm318 = vcmp.ge.f32.partialorder %v190, 0.0
        %vm319 = vcmp.ge.f32.partialorder %v191, 0.0
        %vm320 = vcmp.ge.f32.partialorder %v192, 0.0
        %vm321 = vcmp.ge.f32.partialorder %v193, 0.0
        %vm322 = vcmp.ge.f32.partialorder %v194, 0.0
        %vm323 = vcmp.ge.f32.partialorder %v195, 0.0
        %vm324 = vcmp.ge.f32.partialorder %v196, 0.0
        %vm325 = vcmp.ge.f32.partialorder %v197, 0.0
        %vm326 = vcmp.ge.f32.partialorder %v198, 0.0
        %vm327 = vcmp.ge.f32.partialorder %v199, 0.0
        %vm328 = vcmp.ge.f32.partialorder %v200, 0.0
        %vm329 = vcmp.ge.f32.partialorder %v201, 0.0
        %vm330 = vcmp.ge.f32.partialorder %v202, 0.0
        %vm331 = vcmp.ge.f32.partialorder %v203, 0.0
        %vm332 = vcmp.ge.f32.partialorder %v204, 0.0
        %vm333 = vcmp.ge.f32.partialorder %v205, 0.0
        %vm334 = vcmp.ge.f32.partialorder %v206, 0.0
        %vm335 = vcmp.ge.f32.partialorder %v207, 0.0
        %vm336 = vcmp.ge.f32.partialorder %v208, 0.0
        %vm337 = vcmp.ge.f32.partialorder %v209, 0.0
        %vm338 = vcmp.ge.f32.partialorder %v210, 0.0
        %vm339 = vcmp.ge.f32.partialorder %v211, 0.0
        %vm340 = vcmp.ge.f32.partialorder %v212, 0.0
        %vm341 = vcmp.ge.f32.partialorder %v213, 0.0
        %vm342 = vcmp.ge.f32.partialorder %v214, 0.0
        %vm343 = vcmp.ge.f32.partialorder %v215, 0.0
        %vm344 = vcmp.ge.f32.partialorder %v216, 0.0
        %vm345 = vcmp.ge.f32.partialorder %v217, 0.0
        %vm346 = vcmp.ge.f32.partialorder %v218, 0.0
        %vm347 = vcmp.ge.f32.partialorder %v219, 0.0
        %vm348 = vcmp.ge.f32.partialorder %v220, 0.0
        %vm349 = vcmp.ge.f32.partialorder %v221, 0.0
        %vm350 = vcmp.ge.f32.partialorder %v222, 0.0
        %vm351 = vcmp.ge.f32.partialorder %v223, 0.0
        %vm352 = vcmp.ge.f32.partialorder %v224, 0.0
        %vm353 = vcmp.ge.f32.partialorder %v225, 0.0
        %vm354 = vcmp.ge.f32.partialorder %v226, 0.0
        %vm355 = vcmp.ge.f32.partialorder %v227, 0.0
        %vm356 = vcmp.ge.f32.partialorder %v228, 0.0
        %vm357 = vcmp.ge.f32.partialorder %v229, 0.0
        %vm358 = vcmp.ge.f32.partialorder %v230, 0.0
        %vm359 = vcmp.ge.f32.partialorder %v231, 0.0
        %vm360 = vcmp.ge.f32.partialorder %v232, 0.0
        %vm361 = vcmp.ge.f32.partialorder %v233, 0.0
        %vm362 = vcmp.ge.f32.partialorder %v234, 0.0
        %vm363 = vcmp.ge.f32.partialorder %v235, 0.0
        %vm364 = vcmp.ge.f32.partialorder %v236, 0.0
        %vm365 = vcmp.ge.f32.partialorder %v237, 0.0
        %vm366 = vcmp.ge.f32.partialorder %v238, 0.0
        %vm367 = vcmp.ge.f32.partialorder %v239, 0.0
        %vm368 = vcmp.ge.f32.partialorder %v240, 0.0
        %vm369 = vcmp.ge.f32.partialorder %v241, 0.0
        %vm370 = vcmp.ge.f32.partialorder %v242, 0.0
        %vm371 = vcmp.ge.f32.partialorder %v243, 0.0
        %vm372 = vcmp.ge.f32.partialorder %v244, 0.0
        %vm373 = vcmp.ge.f32.partialorder %v245, 0.0
        %vm374 = vcmp.ge.f32.partialorder %v246, 0.0
        %vm375 = vcmp.ge.f32.partialorder %v247, 0.0
        %vm376 = vcmp.ge.f32.partialorder %v248, 0.0
        %vm377 = vcmp.ge.f32.partialorder %v249, 0.0
        %vm378 = vcmp.ge.f32.partialorder %v250, 0.0
        %vm379 = vcmp.ge.f32.partialorder %v251, 0.0
        %vm380 = vcmp.ge.f32.partialorder %v252, 0.0
        %vm381 = vcmp.ge.f32.partialorder %v253, 0.0
        %vm382 = vcmp.ge.f32.partialorder %v254, 0.0
        %vm383 = vcmp.ge.f32.partialorder %v255, 0.0
        %vm384 = vcmp.ge.f32.partialorder %v256, 0.0
        %vm385 = vcmp.ge.f32.partialorder %v257, 0.0
        %vm386 = vcmp.ge.f32.partialorder %v258, 0.0
        %vm387 = vcmp.ge.f32.partialorder %v259, 0.0
        %vm388 = vcmp.ge.f32.partialorder %v260, 0.0
        %vm389 = vcmp.ge.f32.partialorder %v261, 0.0
        %vm390 = vcmp.ge.f32.partialorder %v262, 0.0
        %vm391 = vcmp.ge.f32.partialorder %v263, 0.0
        %vm392 = vcmp.ge.f32.partialorder %v264, 0.0
        %vm393 = vcmp.ge.f32.partialorder %v265, 0.0
        %vm394 = vcmp.ge.f32.partialorder %v266, 0.0
        %vm395 = vcmp.ge.f32.partialorder %v267, 0.0
        %v396 = vmul.f32 %v140, 0.1
        %v397 = vmul.f32 %v141, 0.1
        %v398 = vmul.f32 %v142, 0.1
        %v399 = vmul.f32 %v143, 0.1
        %v400 = vmul.f32 %v144, 0.1
        %v401 = vmul.f32 %v145, 0.1
        %v402 = vmul.f32 %v146, 0.1
        %v403 = vmul.f32 %v147, 0.1
        %v404 = vmul.f32 %v148, 0.1
        %v405 = vmul.f32 %v149, 0.1
        %v406 = vmul.f32 %v150, 0.1
        %v407 = vmul.f32 %v151, 0.1
        %v408 = vmul.f32 %v152, 0.1
        %v409 = vmul.f32 %v153, 0.1
        %v410 = vmul.f32 %v154, 0.1
        %v411 = vmul.f32 %v155, 0.1
        %v412 = vmul.f32 %v156, 0.1
        %v413 = vmul.f32 %v157, 0.1
        %v414 = vmul.f32 %v158, 0.1
        %v415 = vmul.f32 %v159, 0.1
        %v416 = vmul.f32 %v160, 0.1
        %v417 = vmul.f32 %v161, 0.1
        %v418 = vmul.f32 %v162, 0.1
        %v419 = vmul.f32 %v163, 0.1
        %v420 = vmul.f32 %v164, 0.1
        %v421 = vmul.f32 %v165, 0.1
        %v422 = vmul.f32 %v166, 0.1
        %v423 = vmul.f32 %v167, 0.1
        %v424 = vmul.f32 %v168, 0.1
        %v425 = vmul.f32 %v169, 0.1
        %v426 = vmul.f32 %v170, 0.1
        %v427 = vmul.f32 %v171, 0.1
        %v428 = vmul.f32 %v172, 0.1
        %v429 = vmul.f32 %v173, 0.1
        %v430 = vmul.f32 %v174, 0.1
        %v431 = vmul.f32 %v175, 0.1
        %v432 = vmul.f32 %v176, 0.1
        %v433 = vmul.f32 %v177, 0.1
        %v434 = vmul.f32 %v178, 0.1
        %v435 = vmul.f32 %v179, 0.1
        %v436 = vmul.f32 %v180, 0.1
        %v437 = vmul.f32 %v181, 0.1
        %v438 = vmul.f32 %v182, 0.1
        %v439 = vmul.f32 %v183, 0.1
        %v440 = vmul.f32 %v184, 0.1
        %v441 = vmul.f32 %v185, 0.1
        %v442 = vmul.f32 %v186, 0.1
        %v443 = vmul.f32 %v187, 0.1
        %v444 = vmul.f32 %v188, 0.1
        %v445 = vmul.f32 %v189, 0.1
        %v446 = vmul.f32 %v190, 0.1
        %v447 = vmul.f32 %v191, 0.1
        %v448 = vmul.f32 %v192, 0.1
        %v449 = vmul.f32 %v193, 0.1
        %v450 = vmul.f32 %v194, 0.1
        %v451 = vmul.f32 %v195, 0.1
        %v452 = vmul.f32 %v196, 0.1
        %v453 = vmul.f32 %v197, 0.1
        %v454 = vmul.f32 %v198, 0.1
        %v455 = vmul.f32 %v199, 0.1
        %v456 = vmul.f32 %v200, 0.1
        %v457 = vmul.f32 %v201, 0.1
        %v458 = vmul.f32 %v202, 0.1
        %v459 = vmul.f32 %v203, 0.1
        %v460 = vmul.f32 %v204, 0.1
        %v461 = vmul.f32 %v205, 0.1
        %v462 = vmul.f32 %v206, 0.1
        %v463 = vmul.f32 %v207, 0.1
        %v464 = vmul.f32 %v208, 0.1
        %v465 = vmul.f32 %v209, 0.1
        %v466 = vmul.f32 %v210, 0.1
        %v467 = vmul.f32 %v211, 0.1
        %v468 = vmul.f32 %v212, 0.1
        %v469 = vmul.f32 %v213, 0.1
        %v470 = vmul.f32 %v214, 0.1
        %v471 = vmul.f32 %v215, 0.1
        %v472 = vmul.f32 %v216, 0.1
        %v473 = vmul.f32 %v217, 0.1
        %v474 = vmul.f32 %v218, 0.1
        %v475 = vmul.f32 %v219, 0.1
        %v476 = vmul.f32 %v220, 0.1
        %v477 = vmul.f32 %v221, 0.1
        %v478 = vmul.f32 %v222, 0.1
        %v479 = vmul.f32 %v223, 0.1
        %v480 = vmul.f32 %v224, 0.1
        %v481 = vmul.f32 %v225, 0.1
        %v482 = vmul.f32 %v226, 0.1
        %v483 = vmul.f32 %v227, 0.1
        %v484 = vmul.f32 %v228, 0.1
        %v485 = vmul.f32 %v229, 0.1
        %v486 = vmul.f32 %v230, 0.1
        %v487 = vmul.f32 %v231, 0.1
        %v488 = vmul.f32 %v232, 0.1
        %v489 = vmul.f32 %v233, 0.1
        %v490 = vmul.f32 %v234, 0.1
        %v491 = vmul.f32 %v235, 0.1
        %v492 = vmul.f32 %v236, 0.1
        %v493 = vmul.f32 %v237, 0.1
        %v494 = vmul.f32 %v238, 0.1
        %v495 = vmul.f32 %v239, 0.1
        %v496 = vmul.f32 %v240, 0.1
        %v497 = vmul.f32 %v241, 0.1
        %v498 = vmul.f32 %v242, 0.1
        %v499 = vmul.f32 %v243, 0.1
        %v500 = vmul.f32 %v244, 0.1
        %v501 = vmul.f32 %v245, 0.1
        %v502 = vmul.f32 %v246, 0.1
        %v503 = vmul.f32 %v247, 0.1
        %v504 = vmul.f32 %v248, 0.1
        %v505 = vmul.f32 %v249, 0.1
        %v506 = vmul.f32 %v250, 0.1
        %v507 = vmul.f32 %v251, 0.1
        %v508 = vmul.f32 %v252, 0.1
        %v509 = vmul.f32 %v253, 0.1
        %v510 = vmul.f32 %v254, 0.1
        %v511 = vmul.f32 %v255, 0.1
        %v512 = vmul.f32 %v256, 0.1
        %v513 = vmul.f32 %v257, 0.1
        %v514 = vmul.f32 %v258, 0.1
        %v515 = vmul.f32 %v259, 0.1
        %v516 = vmul.f32 %v260, 0.1
        %v517 = vmul.f32 %v261, 0.1
        %v518 = vmul.f32 %v262, 0.1
        %v519 = vmul.f32 %v263, 0.1
        %v520 = vmul.f32 %v264, 0.1
        %v521 = vmul.f32 %v265, 0.1
        %v522 = vmul.f32 %v266, 0.1
        %v523 = vmul.f32 %v267, 0.1
        %v524 = vsel %vm268, %v140, %v396
        %v525 = vsel %vm269, %v141, %v397
        %v526 = vsel %vm270, %v142, %v398
        %v527 = vsel %vm271, %v143, %v399
        %v528 = vsel %vm272, %v144, %v400
        %v529 = vsel %vm273, %v145, %v401
        %v530 = vsel %vm274, %v146, %v402
        %v531 = vsel %vm275, %v147, %v403
        %v532 = vsel %vm276, %v148, %v404
        %v533 = vsel %vm277, %v149, %v405
        %v534 = vsel %vm278, %v150, %v406
        %v535 = vsel %vm279, %v151, %v407
        %v536 = vsel %vm280, %v152, %v408
        %v537 = vsel %vm281, %v153, %v409
        %v538 = vsel %vm282, %v154, %v410
        %v539 = vsel %vm283, %v155, %v411
        %v540 = vsel %vm284, %v156, %v412
        %v541 = vsel %vm285, %v157, %v413
        %v542 = vsel %vm286, %v158, %v414
        %v543 = vsel %vm287, %v159, %v415
        %v544 = vsel %vm288, %v160, %v416
        %v545 = vsel %vm289, %v161, %v417
        %v546 = vsel %vm290, %v162, %v418
        %v547 = vsel %vm291, %v163, %v419
        %v548 = vsel %vm292, %v164, %v420
        %v549 = vsel %vm293, %v165, %v421
        %v550 = vsel %vm294, %v166, %v422
        %v551 = vsel %vm295, %v167, %v423
        %v552 = vsel %vm296, %v168, %v424
        %v553 = vsel %vm297, %v169, %v425
        %v554 = vsel %vm298, %v170, %v426
        %v555 = vsel %vm299, %v171, %v427
        %v556 = vsel %vm300, %v172, %v428
        %v557 = vsel %vm301, %v173, %v429
        %v558 = vsel %vm302, %v174, %v430
        %v559 = vsel %vm303, %v175, %v431
        %v560 = vsel %vm304, %v176, %v432
        %v561 = vsel %vm305, %v177, %v433
        %v562 = vsel %vm306, %v178, %v434
        %v563 = vsel %vm307, %v179, %v435
        %v564 = vsel %vm308, %v180, %v436
        %v565 = vsel %vm309, %v181, %v437
        %v566 = vsel %vm310, %v182, %v438
        %v567 = vsel %vm311, %v183, %v439
        %v568 = vsel %vm312, %v184, %v440
        %v569 = vsel %vm313, %v185, %v441
        %v570 = vsel %vm314, %v186, %v442
        %v571 = vsel %vm315, %v187, %v443
        %v572 = vsel %vm316, %v188, %v444
        %v573 = vsel %vm317, %v189, %v445
        %v574 = vsel %vm318, %v190, %v446
        %v575 = vsel %vm319, %v191, %v447
        %v576 = vsel %vm320, %v192, %v448
        %v577 = vsel %vm321, %v193, %v449
        %v578 = vsel %vm322, %v194, %v450
        %v579 = vsel %vm323, %v195, %v451
        %v580 = vsel %vm324, %v196, %v452
        %v581 = vsel %vm325, %v197, %v453
        %v582 = vsel %vm326, %v198, %v454
        %v583 = vsel %vm327, %v199, %v455
        %v584 = vsel %vm328, %v200, %v456
        %v585 = vsel %vm329, %v201, %v457
        %v586 = vsel %vm330, %v202, %v458
        %v587 = vsel %vm331, %v203, %v459
        %v588 = vsel %vm332, %v204, %v460
        %v589 = vsel %vm333, %v205, %v461
        %v590 = vsel %vm334, %v206, %v462
        %v591 = vsel %vm335, %v207, %v463
        %v592 = vsel %vm336, %v208, %v464
        %v593 = vsel %vm337, %v209, %v465
        %v594 = vsel %vm338, %v210, %v466
        %v595 = vsel %vm339, %v211, %v467
        %v596 = vsel %vm340, %v212, %v468
        %v597 = vsel %vm341, %v213, %v469
        %v598 = vsel %vm342, %v214, %v470
        %v599 = vsel %vm343, %v215, %v471
        %v600 = vsel %vm344, %v216, %v472
        %v601 = vsel %vm345, %v217, %v473
        %v602 = vsel %vm346, %v218, %v474
        %v603 = vsel %vm347, %v219, %v475
        %v604 = vsel %vm348, %v220, %v476
        %v605 = vsel %vm349, %v221, %v477
        %v606 = vsel %vm350, %v222, %v478
        %v607 = vsel %vm351, %v223, %v479
        %v608 = vsel %vm352, %v224, %v480
        %v609 = vsel %vm353, %v225, %v481
        %v610 = vsel %vm354, %v226, %v482
        %v611 = vsel %vm355, %v227, %v483
        %v612 = vsel %vm356, %v228, %v484
        %v613 = vsel %vm357, %v229, %v485
        %v614 = vsel %vm358, %v230, %v486
        %v615 = vsel %vm359, %v231, %v487
        %v616 = vsel %vm360, %v232, %v488
        %v617 = vsel %vm361, %v233, %v489
        %v618 = vsel %vm362, %v234, %v490
        %v619 = vsel %vm363, %v235, %v491
        %v620 = vsel %vm364, %v236, %v492
        %v621 = vsel %vm365, %v237, %v493
        %v622 = vsel %vm366, %v238, %v494
        %v623 = vsel %vm367, %v239, %v495
        %v624 = vsel %vm368, %v240, %v496
        %v625 = vsel %vm369, %v241, %v497
        %v626 = vsel %vm370, %v242, %v498
        %v627 = vsel %vm371, %v243, %v499
        %v628 = vsel %vm372, %v244, %v500
        %v629 = vsel %vm373, %v245, %v501
        %v630 = vsel %vm374, %v246, %v502
        %v631 = vsel %vm375, %v247, %v503
        %v632 = vsel %vm376, %v248, %v504
        %v633 = vsel %vm377, %v249, %v505
        %v634 = vsel %vm378, %v250, %v506
        %v635 = vsel %vm379, %v251, %v507
        %v636 = vsel %vm380, %v252, %v508
        %v637 = vsel %vm381, %v253, %v509
        %v638 = vsel %vm382, %v254, %v510
        %v639 = vsel %vm383, %v255, %v511
        %v640 = vsel %vm384, %v256, %v512
        %v641 = vsel %vm385, %v257, %v513
        %v642 = vsel %vm386, %v258, %v514
        %v643 = vsel %vm387, %v259, %v515
        %v644 = vsel %vm388, %v260, %v516
        %v645 = vsel %vm389, %v261, %v517
        %v646 = vsel %vm390, %v262, %v518
        %v647 = vsel %vm391, %v263, %v519
        %v648 = vsel %vm392, %v264, %v520
        %v649 = vsel %vm393, %v265, %v521
        %v650 = vsel %vm394, %v266, %v522
        %v651 = vsel %vm395, %v267, %v523
        %652 = vst [vmem:[%s137] sm:$0xff] %v524
        %653 = vst [vmem:[%s137 + $0x8] sm:$0xff] %v525
        %654 = vst [vmem:[%s137 + $0x10] sm:$0xff] %v526
        %655 = vst [vmem:[%s137 + $0x18] sm:$0xff] %v527
        %656 = vst [vmem:[%s137 + $0x20] sm:$0xff] %v528
        %657 = vst [vmem:[%s137 + $0x28] sm:$0xff] %v529
        %658 = vst [vmem:[%s137 + $0x30] sm:$0xff] %v530
        %659 = vst [vmem:[%s137 + $0x38] sm:$0xff] %v531
        %660 = vst [vmem:[%s137 + $0x40] sm:$0xff] %v532
        %661 = vst [vmem:[%s137 + $0x48] sm:$0xff] %v533
        %662 = vst [vmem:[%s137 + $0x50] sm:$0xff] %v534
        %663 = vst [vmem:[%s137 + $0x58] sm:$0xff] %v535
        %664 = vst [vmem:[%s137 + $0x60] sm:$0xff] %v536
        %665 = vst [vmem:[%s137 + $0x68] sm:$0xff] %v537
        %666 = vst [vmem:[%s137 + $0x70] sm:$0xff] %v538
        %667 = vst [vmem:[%s137 + $0x78] sm:$0xff] %v539
        %668 = vst [vmem:[%s137 + $0x80] sm:$0xff] %v540
        %669 = vst [vmem:[%s137 + $0x88] sm:$0xff] %v541
        %670 = vst [vmem:[%s137 + $0x90] sm:$0xff] %v542
        %671 = vst [vmem:[%s137 + $0x98] sm:$0xff] %v543
        %672 = vst [vmem:[%s137 + $0xa0] sm:$0xff] %v544
        %673 = vst [vmem:[%s137 + $0xa8] sm:$0xff] %v545
        %674 = vst [vmem:[%s137 + $0xb0] sm:$0xff] %v546
        %675 = vst [vmem:[%s137 + $0xb8] sm:$0xff] %v547
        %676 = vst [vmem:[%s137 + $0xc0] sm:$0xff] %v548
        %677 = vst [vmem:[%s137 + $0xc8] sm:$0xff] %v549
        %678 = vst [vmem:[%s137 + $0xd0] sm:$0xff] %v550
        %679 = vst [vmem:[%s137 + $0xd8] sm:$0xff] %v551
        %680 = vst [vmem:[%s137 + $0xe0] sm:$0xff] %v552
        %681 = vst [vmem:[%s137 + $0xe8] sm:$0xff] %v553
        %682 = vst [vmem:[%s137 + $0xf0] sm:$0xff] %v554
        %683 = vst [vmem:[%s137 + $0xf8] sm:$0xff] %v555
        %684 = vst [vmem:[%s137 + $0x100] sm:$0xff] %v556
        %685 = vst [vmem:[%s137 + $0x108] sm:$0xff] %v557
        %686 = vst [vmem:[%s137 + $0x110] sm:$0xff] %v558
        %687 = vst [vmem:[%s137 + $0x118] sm:$0xff] %v559
        %688 = vst [vmem:[%s137 + $0x120] sm:$0xff] %v560
        %689 = vst [vmem:[%s137 + $0x128] sm:$0xff] %v561
        %690 = vst [vmem:[%s137 + $0x130] sm:$0xff] %v562
        %691 = vst [vmem:[%s137 + $0x138] sm:$0xff] %v563
        %692 = vst [vmem:[%s137 + $0x140] sm:$0xff] %v564
        %693 = vst [vmem:[%s137 + $0x148] sm:$0xff] %v565
        %694 = vst [vmem:[%s137 + $0x150] sm:$0xff] %v566
        %695 = vst [vmem:[%s137 + $0x158] sm:$0xff] %v567
        %696 = vst [vmem:[%s137 + $0x160] sm:$0xff] %v568
        %697 = vst [vmem:[%s137 + $0x168] sm:$0xff] %v569
        %698 = vst [vmem:[%s137 + $0x170] sm:$0xff] %v570
        %699 = vst [vmem:[%s137 + $0x178] sm:$0xff] %v571
        %700 = vst [vmem:[%s137 + $0x180] sm:$0xff] %v572
        %701 = vst [vmem:[%s137 + $0x188] sm:$0xff] %v573
        %702 = vst [vmem:[%s137 + $0x190] sm:$0xff] %v574
        %703 = vst [vmem:[%s137 + $0x198] sm:$0xff] %v575
        %704 = vst [vmem:[%s137 + $0x1a0] sm:$0xff] %v576
        %705 = vst [vmem:[%s137 + $0x1a8] sm:$0xff] %v577
        %706 = vst [vmem:[%s137 + $0x1b0] sm:$0xff] %v578
        %707 = vst [vmem:[%s137 + $0x1b8] sm:$0xff] %v579
        %708 = vst [vmem:[%s137 + $0x1c0] sm:$0xff] %v580
        %709 = vst [vmem:[%s137 + $0x1c8] sm:$0xff] %v581
        %710 = vst [vmem:[%s137 + $0x1d0] sm:$0xff] %v582
        %711 = vst [vmem:[%s137 + $0x1d8] sm:$0xff] %v583
        %712 = vst [vmem:[%s137 + $0x1e0] sm:$0xff] %v584
        %713 = vst [vmem:[%s137 + $0x1e8] sm:$0xff] %v585
        %714 = vst [vmem:[%s137 + $0x1f0] sm:$0xff] %v586
        %715 = vst [vmem:[%s137 + $0x1f8] sm:$0xff] %v587
        %716 = vst [vmem:[%s137 + $0x200] sm:$0xff] %v588
        %717 = vst [vmem:[%s137 + $0x208] sm:$0xff] %v589
        %718 = vst [vmem:[%s137 + $0x210] sm:$0xff] %v590
        %719 = vst [vmem:[%s137 + $0x218] sm:$0xff] %v591
        %720 = vst [vmem:[%s137 + $0x220] sm:$0xff] %v592
        %721 = vst [vmem:[%s137 + $0x228] sm:$0xff] %v593
        %722 = vst [vmem:[%s137 + $0x230] sm:$0xff] %v594
        %723 = vst [vmem:[%s137 + $0x238] sm:$0xff] %v595
        %724 = vst [vmem:[%s137 + $0x240] sm:$0xff] %v596
        %725 = vst [vmem:[%s137 + $0x248] sm:$0xff] %v597
        %726 = vst [vmem:[%s137 + $0x250] sm:$0xff] %v598
        %727 = vst [vmem:[%s137 + $0x258] sm:$0xff] %v599
        %728 = vst [vmem:[%s137 + $0x260] sm:$0xff] %v600
        %729 = vst [vmem:[%s137 + $0x268] sm:$0xff] %v601
        %730 = vst [vmem:[%s137 + $0x270] sm:$0xff] %v602
        %731 = vst [vmem:[%s137 + $0x278] sm:$0xff] %v603
        %732 = vst [vmem:[%s137 + $0x280] sm:$0xff] %v604
        %733 = vst [vmem:[%s137 + $0x288] sm:$0xff] %v605
        %734 = vst [vmem:[%s137 + $0x290] sm:$0xff] %v606
        %735 = vst [vmem:[%s137 + $0x298] sm:$0xff] %v607
        %736 = vst [vmem:[%s137 + $0x2a0] sm:$0xff] %v608
        %737 = vst [vmem:[%s137 + $0x2a8] sm:$0xff] %v609
        %738 = vst [vmem:[%s137 + $0x2b0] sm:$0xff] %v610
        %739 = vst [vmem:[%s137 + $0x2b8] sm:$0xff] %v611
        %740 = vst [vmem:[%s137 + $0x2c0] sm:$0xff] %v612
        %741 = vst [vmem:[%s137 + $0x2c8] sm:$0xff] %v613
        %742 = vst [vmem:[%s137 + $0x2d0] sm:$0xff] %v614
        %743 = vst [vmem:[%s137 + $0x2d8] sm:$0xff] %v615
        %744 = vst [vmem:[%s137 + $0x2e0] sm:$0xff] %v616
        %745 = vst [vmem:[%s137 + $0x2e8] sm:$0xff] %v617
        %746 = vst [vmem:[%s137 + $0x2f0] sm:$0xff] %v618
        %747 = vst [vmem:[%s137 + $0x2f8] sm:$0xff] %v619
        %748 = vst [vmem:[%s137 + $0x300] sm:$0xff] %v620
        %749 = vst [vmem:[%s137 + $0x308] sm:$0xff] %v621
        %750 = vst [vmem:[%s137 + $0x310] sm:$0xff] %v622
        %751 = vst [vmem:[%s137 + $0x318] sm:$0xff] %v623
        %752 = vst [vmem:[%s137 + $0x320] sm:$0xff] %v624
        %753 = vst [vmem:[%s137 + $0x328] sm:$0xff] %v625
        %754 = vst [vmem:[%s137 + $0x330] sm:$0xff] %v626
        %755 = vst [vmem:[%s137 + $0x338] sm:$0xff] %v627
        %756 = vst [vmem:[%s137 + $0x340] sm:$0xff] %v628
        %757 = vst [vmem:[%s137 + $0x348] sm:$0xff] %v629
        %758 = vst [vmem:[%s137 + $0x350] sm:$0xff] %v630
        %759 = vst [vmem:[%s137 + $0x358] sm:$0xff] %v631
        %760 = vst [vmem:[%s137 + $0x360] sm:$0xff] %v632
        %761 = vst [vmem:[%s137 + $0x368] sm:$0xff] %v633
        %762 = vst [vmem:[%s137 + $0x370] sm:$0xff] %v634
        %763 = vst [vmem:[%s137 + $0x378] sm:$0xff] %v635
        %764 = vst [vmem:[%s137 + $0x380] sm:$0xff] %v636
        %765 = vst [vmem:[%s137 + $0x388] sm:$0xff] %v637
        %766 = vst [vmem:[%s137 + $0x390] sm:$0xff] %v638
        %767 = vst [vmem:[%s137 + $0x398] sm:$0xff] %v639
        %768 = vst [vmem:[%s137 + $0x3a0] sm:$0xff] %v640
        %769 = vst [vmem:[%s137 + $0x3a8] sm:$0xff] %v641
        %770 = vst [vmem:[%s137 + $0x3b0] sm:$0xff] %v642
        %771 = vst [vmem:[%s137 + $0x3b8] sm:$0xff] %v643
        %772 = vst [vmem:[%s137 + $0x3c0] sm:$0xff] %v644
        %773 = vst [vmem:[%s137 + $0x3c8] sm:$0xff] %v645
        %774 = vst [vmem:[%s137 + $0x3d0] sm:$0xff] %v646
        %775 = vst [vmem:[%s137 + $0x3d8] sm:$0xff] %v647
        %776 = vst [vmem:[%s137 + $0x3e0] sm:$0xff] %v648
        %777 = vst [vmem:[%s137 + $0x3e8] sm:$0xff] %v649
        %778 = vst [vmem:[%s137 + $0x3f0] sm:$0xff] %v650
        %779 = vst [vmem:[%s137 + $0x3f8] sm:$0xff] %v651
        %s780 = sand.u32 %s52, 1
        %s781 = scalar_lea.sflag [#allocation4], %s780
        %s782 = sand.u32 %s52, 1
        %s783 = smul.addr %s782, 1024
        %s784 = scalar_lea.vmem [#allocation5], %s783
        // Predicated region
        $region29: #{tpu_custom_call.1} parent=23 // pred_check
          %p785 = pneg %p62
        $region30: #{tpu_custom_call.1} parent=23 // pred_check_branch
          %787 = sbr.rel (%p785) target = $region32
        $region31: #{tpu_custom_call.1} parent=23 // pred_region
          %s788 = smul.u32 16, %s18
          %790 = vsyncadd %s781, 0
          %s791 = smul.addr %s788, 8
          %s792 = smul.addr %s791, 8
          %s793 = scalar_lea.hbm %s1, %s792
          %s794 = sshll.u32 %s784, 4
          %s795 = int_to_ptr.vmem [resolvable:$true] %s794
          %s796 = sshll.u32 %s793, 4
          %s797 = int_to_ptr.hbm [resolvable:$true] %s796
          %802 = dma.vmem_to_hbm [thread:$0]  %s795, 16384, %s797, %s781, 1024, 1024, 64
        $region32: #{tpu_custom_call.1} parent=23 // pred_fallthru
          _
      $region24: #{tpu_custom_call.1} parent=5 // pred_fallthru
        _
      %p803 = scmp.le.s32.totalorder 2, %s13
      // Predicated region
      $region33: #{tpu_custom_call.1} parent=5 // pred_check
        %p804 = pneg %p803
      $region34: #{tpu_custom_call.1} parent=5 // pred_check_branch
        %806 = sbr.rel (%p804) target = $region36
      $region35: #{tpu_custom_call.1} parent=5 // pred_region
        %s807 = ssub.s32 %s13, 2
        // Predicated region
        $region37: #{tpu_custom_call.1} parent=35 // pred_check
          %p808 = pneg %p68
        $region38: #{tpu_custom_call.1} parent=35 // pred_check_branch
          %810 = sbr.rel (%p808) target = $region40
        $region39: #{tpu_custom_call.1} parent=35 // pred_region
          %s811 = sand.u32 %s53, 1
          %s812 = scalar_lea.sflag [#allocation4], %s811
          %s813 = sand.u32 %s53, 1
          %s814 = smul.addr %s813, 1024
          %s815 = scalar_lea.vmem [#allocation5], %s814
          %817 = dma.done %s812, 16384
        $region40: #{tpu_custom_call.1} parent=35 // pred_fallthru
          _
      $region36: #{tpu_custom_call.1} parent=5 // pred_fallthru
        _
    $region6: #{tpu_custom_call.1} parent=1 // loop_footer
      %s17 = sadd.s32 1, %s13
    $region7: #{tpu_custom_call.1} parent=1 // loop_footer_branch
      %12 = sbr.rel target = $region3
    $region8: #{tpu_custom_call.1} parent=1 // loop_exit
      _
    %818 = vsyncpa [#allocation3], 1
    %s819 = scalar_lea.sflag [#allocation3], 1
    %820 = vsyncpa %s819, 1
    %821 = vsyncpa [#allocation4], 1
    %s822 = scalar_lea.sflag [#allocation4], 1
    %823 = vsyncpa %s822, 1

</llo_original>
